<compile_context>
chip_gen: v7x
topology: tpu7x:2x2x1
jax: 0.10.0
libtpu: 0.0.40
codegen_flags: <defaults>
</compile_context>

<pallas_src>
import jax
import jax.numpy as jnp
from jax.experimental import pallas as pl
from jax.experimental.pallas import tpu as pltpu


def _linear_kernel(x_ref, w_ref, b_ref, o_ref):
    # x_ref: (tm, K)  bf16 merged-patch tile
    # w_ref: (K, N)   bf16 weight (transposed from PyTorch's (N, K))
    # b_ref: (1, N)   f32 bias
    # o_ref: (tm, N)  output tile
    acc = jnp.dot(x_ref[...], w_ref[...], preferred_element_type=jnp.float32)
    o_ref[...] = (acc + b_ref[...]).astype(o_ref.dtype)


def _round_up(x, m):
    return (x + m - 1) // m * m


def _physical_vmem_bytes():
    try:
        info = pltpu.get_tpu_info()
        v = getattr(info, "vmem_capacity_bytes", None)
        if v:
            return int(v)
    except Exception:
        pass
    return 64 * 1024 * 1024  # conservative default (v7x-sized VMEM)


def patch_merging_forward(x, weight, bias, downscaling_factor, *, out_dtype=None):
    """x: (b, c, h, w) NCHW.  weight: (out_ch, c*df*df), bias: (out_ch,) as in
    nn.Linear.  Returns (b, h//df, w//df, out_ch) — same as the PyTorch module."""
    b, c, h, w = x.shape
    df = downscaling_factor
    new_h, new_w = h // df, w // df
    in_feat = c * df * df
    out_ch = weight.shape[0]
    out_dtype = x.dtype if out_dtype is None else jnp.dtype(out_dtype)
    out_bytes = jnp.dtype(out_dtype).itemsize
    M = b * new_h * new_w

    # ---- nn.Unfold(kernel=df, stride=df) + view + permute (data movement) ----
    # Unfold flattens each patch as (c, kh, kw) with c slowest-varying.  The
    # reshape/transpose/cast below form one XLA fusion, so the bf16 merged
    # patch matrix is materialized in HBM exactly once.
    xm = x.reshape(b, c, new_h, df, new_w, df)
    xm = jnp.transpose(xm, (0, 2, 4, 1, 3, 5))           # (b, nh, nw, c, df, df)
    xm = xm.reshape(M, in_feat).astype(jnp.bfloat16)

    w_t = jnp.transpose(weight).astype(jnp.bfloat16)     # (in_feat, out_ch)
    b2d = bias.astype(jnp.float32).reshape(1, out_ch)

    # ---- per-generation tile / VMEM budget ----
    phys_vmem = _physical_vmem_bytes()
    big_vmem = phys_vmem >= 100 * 1024 * 1024            # v5e / v6e (128 MiB)
    vmem_budget = (phys_vmem * 5) // 8                   # ~80 MiB v5e/v6e, ~40 MiB v7x
    tm_target = 2048 if big_vmem else 512

    # Row tile: >= 8 grid steps when M is large (megacore balance + pipeline
    # depth), 256-aligned for full 256-wide MXU passes / dense bf16 sublanes,
    # never exceeding M (rounded to the bf16 sublane-pack of 16).
    tm = min(tm_target, max(256, (M // (8 * 256)) * 256))
    tm = min(tm, _round_up(M, 16))
    tm = max(tm, 16)

    def vmem_est(t):
        # x / out tiles double-buffered; weight & bias counted double-buffered
        # too so the estimate also covers the non-Buffered(1) fallback.
        return (2 * in_feat * out_ch * 2 + 2 * out_ch * 4
                + 2 * t * in_feat * 2 + 2 * t * out_ch * out_bytes)

    while vmem_est(tm) > vmem_budget and tm > 128:
        nt = tm // 2
        nt = (nt // 256) * 256 if nt >= 256 else max(128, (nt // 128) * 128)
        tm = nt

    grid = (pl.cdiv(M, tm),)
    # Accurate VMEM request with modest headroom; stay well below physical.
    vmem_limit = int(min(max(vmem_est(tm) + 16 * 1024 * 1024, 32 * 1024 * 1024),
                         (phys_vmem * 7) // 8))
    cost = pl.CostEstimate(
        flops=2 * M * in_feat * out_ch,
        transcendentals=0,
        bytes_accessed=(M * in_feat * 2 + in_feat * out_ch * 2
                        + out_ch * 4 + M * out_ch * out_bytes))

    def run(single_buffer_invariants):
        # Weight / bias blocks are grid-invariant (index_map always (0, 0));
        # Buffered(1) avoids reserving a second, never-used VMEM buffer.
        inv = ({"pipeline_mode": pl.Buffered(1)} if single_buffer_invariants else {})
        call = pl.pallas_call(
            _linear_kernel,
            out_shape=jax.ShapeDtypeStruct((M, out_ch), out_dtype),
            grid_spec=pltpu.PrefetchScalarGridSpec(
                num_scalar_prefetch=0,
                grid=grid,
                in_specs=[
                    pl.BlockSpec((tm, in_feat), lambda i: (i, 0)),
                    pl.BlockSpec((in_feat, out_ch), lambda i: (0, 0), **inv),
                    pl.BlockSpec((1, out_ch), lambda i: (0, 0), **inv),
                ],
                out_specs=pl.BlockSpec((tm, out_ch), lambda i: (i, 0)),
            ),
            compiler_params=pltpu.CompilerParams(
                dimension_semantics=("parallel",),
                vmem_limit_bytes=vmem_limit,
                # Let XLA fold the unfold reshape/transpose/cast producer into
                # the kernel's input when it can (harmless when it can't).
                allow_input_fusion=[True, False, False],
            ),
            cost_estimate=cost,
        )
        return call(xm, w_t, b2d)

    try:
        out = run(True)
    except (TypeError, ValueError, NotImplementedError, pltpu.LoweringException):
        # Some jax versions reject single buffering (Buffered(1)); the only
        # cost of the fallback is one extra idle VMEM buffer for the weight.
        out = run(False)

    # (M, out_ch) -> (b, new_h, new_w, out_ch): free, row-major-compatible.
    return out.reshape(b, new_h, new_w, out_ch)


if __name__ == "__main__":
    # Small shapes consistent with the module: b=2, c=4, h=w=16, df=2 -> out 32
    B, C, H, W = 2, 4, 16, 16
    DF = 2
    OUT_CH = 32
    IN_FEAT = C * DF * DF

    key = jax.random.PRNGKey(0)
    kx, kw, kb = jax.random.split(key, 3)
    x = jax.random.normal(kx, (B, C, H, W), dtype=jnp.float32)
    # Deterministic synthetic nn.Linear parameters (same shapes as the module)
    weight = jax.random.normal(kw, (OUT_CH, IN_FEAT), dtype=jnp.float32) * 0.1
    bias = jax.random.normal(kb, (OUT_CH,), dtype=jnp.float32) * 0.1

    out = patch_merging_forward(x, weight, bias, DF)
    out = jax.block_until_ready(out)

    # Pure-JAX f32 reference (kernel uses bf16 MXU operands -> loosened tol).
    xr = x.reshape(B, C, H // DF, DF, W // DF, DF)
    xr = jnp.transpose(xr, (0, 2, 4, 1, 3, 5)).reshape(B, H // DF, W // DF, IN_FEAT)
    ref = xr @ weight.T + bias
    assert out.shape == (B, H // DF, W // DF, OUT_CH)
    assert jnp.allclose(out, ref, atol=2e-2, rtol=2e-2)

    print("KERNEL_OK")
</pallas_src>

<mosaic_0001>
module attributes {stable_mosaic.version = 11 : i64} {
  func.func @_linear_kernel(%arg0: i32, %arg1: memref<128x16xbf16, #tpu.memory_space<vmem>>, %arg2: memref<16x32xbf16, #tpu.memory_space<vmem>>, %arg3: memref<1x32xf32, #tpu.memory_space<vmem>>, %arg4: memref<128x32xf32, #tpu.memory_space<vmem>>) attributes {dimension_semantics = [#tpu.dimension_semantics<parallel>], iteration_bounds = array<i64: 1>, scalar_prefetch = 0 : i64, scratch_operands = 0 : i64, tpu.core_type = #tpu.core_type<tc>, window_params = [{transform_indices = @transform_0, window_bounds = array<i64: 128, 16>}, {pipeline_mode = #tpu.pipeline_mode<synchronous>, transform_indices = @transform_1, window_bounds = array<i64: 16, 32>}, {pipeline_mode = #tpu.pipeline_mode<synchronous>, transform_indices = @transform_2, window_bounds = array<i64: 1, 32>}, {transform_indices = @transform_3, window_bounds = array<i64: 128, 32>}]} {
    %c0 = arith.constant 0 : index
    %c0_0 = arith.constant 0 : index
    %0 = vector.load %arg1[%c0, %c0_0] : memref<128x16xbf16, #tpu.memory_space<vmem>>, vector<128x16xbf16>
    %c0_1 = arith.constant 0 : index
    %c0_2 = arith.constant 0 : index
    %1 = vector.load %arg2[%c0_1, %c0_2] : memref<16x32xbf16, #tpu.memory_space<vmem>>, vector<16x32xbf16>
    %cst = arith.constant dense<0.000000e+00> : vector<128x32xf32>
    %2 = tpu.matmul %0, %1, %cst {dimension_numbers = #tpu.dot_dimension_numbers<[1], [0], [0], [1], [0, 0, 1, 1], [], []>} : vector<128x16xbf16>, vector<16x32xbf16>, vector<128x32xf32> -> vector<128x32xf32>
    %c0_3 = arith.constant 0 : index
    %c0_4 = arith.constant 0 : index
    %3 = vector.load %arg3[%c0_3, %c0_4] : memref<1x32xf32, #tpu.memory_space<vmem>>, vector<1x32xf32>
    %4 = vector.broadcast %3 : vector<1x32xf32> to vector<128x32xf32>
    %5 = arith.addf %2, %4 : vector<128x32xf32>
    %c0_5 = arith.constant 0 : index
    %c0_6 = arith.constant 0 : index
    %6 = vector.load %arg4[%c0_5, %c0_6] : memref<128x32xf32, #tpu.memory_space<vmem>>, vector<128x32xf32>
    tpu.vector_store %arg4[%c0_5, %c0_6], %5 {strides = array<i32>} : memref<128x32xf32, #tpu.memory_space<vmem>>, vector<128x32xf32>,
    return
  }
  func.func @transform_0(%arg0: i32) -> (i32, i32) {
    %c0_i32 = arith.constant 0 : i32
    %c0_i32_0 = arith.constant 0 : i32
    return %arg0, %c0_i32 : i32, i32
  }
  func.func @transform_1(%arg0: i32) -> (i32, i32) {
    %c0_i32 = arith.constant 0 : i32
    %c0_i32_0 = arith.constant 0 : i32
    %c0_i32_1 = arith.constant 0 : i32
    return %c0_i32, %c0_i32_0 : i32, i32
  }
  func.func @transform_2(%arg0: i32) -> (i32, i32) {
    %c0_i32 = arith.constant 0 : i32
    %c0_i32_0 = arith.constant 0 : i32
    %c0_i32_1 = arith.constant 0 : i32
    return %c0_i32, %c0_i32_0 : i32, i32
  }
  func.func @transform_3(%arg0: i32) -> (i32, i32) {
    %c0_i32 = arith.constant 0 : i32
    %c0_i32_0 = arith.constant 0 : i32
    return %arg0, %c0_i32 : i32, i32
  }
}

</mosaic_0001>

<llo_original>
// kernel: tpu_custom_call.1
$region0: #{tpu_custom_call.1}
  #allocation0 [shape = 'u32[]', space=smem, size = 0x4, offset = 0x4, fixed_abs, tag = 'smem constant byte address 0x4 - core index']
  #allocation1 [shape = 'u32[144,128]{1,0:T(1,128)}', space=vmem, size = 0x12000, scoped, tag = 'internal scratch']
  %s0 = inlined_call_operand.vmem [shape: bf16[128,16], index: 0, kind: input, shape index: {}]
  %s1 = inlined_call_operand.vmem [shape: bf16[16,32], index: 1, kind: input, shape index: {}]
  %s2 = inlined_call_operand.vmem [shape: f32[1,32], index: 2, kind: input, shape index: {}]
  %s3 = inlined_call_operand.vmem [shape: f32[128,32], index: 3, kind: output, shape index: {}]
  %s4 = sld [smem:[#allocation0]]
  $region22: #{tpu_custom_call.1} parent=0
    _
  %s6 = ssub.s32 1, %s4
  %s7 = scalar_select 0, %s6, %s4
  // Predicated region
  $region2: #{tpu_custom_call.1} parent=0 // pred_check
    _
  $region3: #{tpu_custom_call.1} parent=0 // pred_check_branch
    %9 = sbr.rel (0) target = $region5
  $region4: #{tpu_custom_call.1} parent=0 // pred_region
    _
  $region5: #{tpu_custom_call.1} parent=0 // pred_fallthru
    _
  // Predicated region
  $region6: #{tpu_custom_call.1} parent=0 // pred_check
    _
  $region7: #{tpu_custom_call.1} parent=0 // pred_check_branch
    %11 = sbr.rel (0) target = $region9
  $region8: #{tpu_custom_call.1} parent=0 // pred_region
    _
  $region9: #{tpu_custom_call.1} parent=0 // pred_fallthru
    _
  // Predicated region
  $region10: #{tpu_custom_call.1} parent=0 // pred_check
    _
  $region11: #{tpu_custom_call.1} parent=0 // pred_check_branch
    %13 = sbr.rel (0) target = $region13
  $region12: #{tpu_custom_call.1} parent=0 // pred_region
    _
  $region13: #{tpu_custom_call.1} parent=0 // pred_fallthru
    _
  %v15 = vld [vmem:[%s0] sm:$0xf]
  %v16 = vld [vmem:[%s0 + $0x4] sm:$0xf]
  %v17 = vld [vmem:[%s0 + $0x8] sm:$0xf]
  %v18 = vld [vmem:[%s0 + $0xc] sm:$0xf]
  %v19 = vld [vmem:[%s0 + $0x10] sm:$0xf]
  %v20 = vld [vmem:[%s0 + $0x14] sm:$0xf]
  %v21 = vld [vmem:[%s0 + $0x18] sm:$0xf]
  %v22 = vld [vmem:[%s0 + $0x1c] sm:$0xf]
  %v23 = vld [vmem:[%s0 + $0x20] sm:$0xf]
  %v24 = vld [vmem:[%s0 + $0x24] sm:$0xf]
  %v25 = vld [vmem:[%s0 + $0x28] sm:$0xf]
  %v26 = vld [vmem:[%s0 + $0x2c] sm:$0xf]
  %v27 = vld [vmem:[%s0 + $0x30] sm:$0xf]
  %v28 = vld [vmem:[%s0 + $0x34] sm:$0xf]
  %v29 = vld [vmem:[%s0 + $0x38] sm:$0xf]
  %v30 = vld [vmem:[%s0 + $0x3c] sm:$0xf]
  %v31 = vld [vmem:[%s1] sm:$0xf]
  %v32 = vld [vmem:[%s1 + $0x4] sm:$0xf]
  %v33 = vld [vmem:[%s2] sm:$0x1]
  %v35 = vlaneseq
  %v36 = vshrl.u32 %v35, 7
  %v37 = vsub.s32 0, %v36
  %v38 = vrot.slane %v33, %v37
  %v56 = vunpack.c.l.b16 %v15
  %v57 = vunpack.c.l.b16 %v16
  %v58 = vunpack.c.l.b16 %v17
  %v59 = vunpack.c.l.b16 %v18
  %v60 = vunpack.c.l.b16 %v19
  %v61 = vunpack.c.l.b16 %v20
  %v62 = vunpack.c.l.b16 %v21
  %v63 = vunpack.c.l.b16 %v22
  %v64 = vunpack.c.l.b16 %v23
  %v65 = vunpack.c.l.b16 %v24
  %v66 = vunpack.c.l.b16 %v25
  %v67 = vunpack.c.l.b16 %v26
  %v68 = vunpack.c.l.b16 %v27
  %v69 = vunpack.c.l.b16 %v28
  %v70 = vunpack.c.l.b16 %v29
  %v71 = vunpack.c.l.b16 %v30
  %v72 = vpack.c.b16 %v57, %v56
  %v73 = vpack.c.b16 %v59, %v58
  %v74 = vpack.c.b16 %v61, %v60
  %v75 = vpack.c.b16 %v63, %v62
  %v76 = vpack.c.b16 %v65, %v64
  %v77 = vpack.c.b16 %v67, %v66
  %v78 = vpack.c.b16 %v69, %v68
  %v79 = vpack.c.b16 %v71, %v70
  %v82 = vunpack.c.l.b16 %v31
  %v83 = vunpack.c.l.b16 %v32
  %v84 = vpack.c.b16 %v83, %v82
  %vm86 = vcmask 130048
  %v88 = vsel %vm86, %v72, 0
  %v91 = vsel %vm86, %v73, 0
  %v94 = vsel %vm86, %v74, 0
  %v97 = vsel %vm86, %v75, 0
  %v100 = vsel %vm86, %v76, 0
  %v103 = vsel %vm86, %v77, 0
  %v106 = vsel %vm86, %v78, 0
  %v109 = vsel %vm86, %v79, 0
  %111 = vmatprep.subr.bf16.mxu0 0
  %112 = vmatpush1.bf16.msra.mxu0 %v84
  %113 = vmatprep.subr.bf16.mxu0 0
  %114 = vmatpush1.bf16.msra.mxu0 0
  %115 = vmatprep.subr.bf16.mxu0 0
  %116 = vmatpush1.bf16.msra.mxu0 0
  %117 = vmatprep.subr.bf16.mxu0 0
  %118 = vmatpush1.bf16.msra.mxu0 0
  %119 = vmatprep.subr.bf16.mxu0 0
  %120 = vmatpush1.bf16.msra.mxu0 0
  %121 = vmatprep.subr.bf16.mxu0 0
  %122 = vmatpush1.bf16.msra.mxu0 0
  %123 = vmatprep.subr.bf16.mxu0 0
  %124 = vmatpush1.bf16.msra.mxu0 0
  %125 = vmatprep.subr.bf16.mxu0 0
  %126 = vmatpush1.bf16.msra.mxu0 0
  %127 = vmatprep.subr.bf16.mxu0 0
  %128 = vmatpush1.bf16.msra.mxu0 0
  %129 = vmatprep.subr.bf16.mxu0 0
  %130 = vmatpush1.bf16.msra.mxu0 0
  %131 = vmatprep.subr.bf16.mxu0 0
  %132 = vmatpush1.bf16.msra.mxu0 0
  %133 = vmatprep.subr.bf16.mxu0 0
  %134 = vmatpush1.bf16.msra.mxu0 0
  %135 = vmatprep.subr.bf16.mxu0 0
  %136 = vmatpush1.bf16.msra.mxu0 0
  %137 = vmatprep.subr.bf16.mxu0 0
  %138 = vmatpush1.bf16.msra.mxu0 0
  %139 = vmatprep.subr.bf16.mxu0 0
  %140 = vmatpush1.bf16.msra.mxu0 0
  %141 = vmatprep.subr.bf16.mxu0 0
  %142 = vmatpush1.bf16.msra.mxu0 0
  %143 = vmatprep.mubr.bf16.mxu0 0
  %144 = vmatmul.mubr.bf16.gmra.mrb[0].mxu0 %v88
  %v145 = vpop.f32.mrb[0].mxu0
  %v146 = vadd.f32 %v38, %v145
  %v147 = vpop.f32.mrb[0].mxu0
  %v148 = vpop.f32.mrb[0].mxu0
  %v149 = vadd.f32 %v38, %v148
  %v150 = vpop.f32.mrb[0].mxu0
  %151 = vmatprep.mubr.bf16.mxu0 0
  %152 = vmatmul.mubr.bf16.gmra.mrb[0].mxu0 %v91
  %v153 = vpop.f32.mrb[0].mxu0
  %v154 = vadd.f32 %v38, %v153
  %v155 = vpop.f32.mrb[0].mxu0
  %v156 = vpop.f32.mrb[0].mxu0
  %v157 = vadd.f32 %v38, %v156
  %v158 = vpop.f32.mrb[0].mxu0
  %159 = vmatprep.mubr.bf16.mxu0 0
  %160 = vmatmul.mubr.bf16.gmra.mrb[0].mxu0 %v94
  %v161 = vpop.f32.mrb[0].mxu0
  %v162 = vadd.f32 %v38, %v161
  %v163 = vpop.f32.mrb[0].mxu0
  %v164 = vpop.f32.mrb[0].mxu0
  %v165 = vadd.f32 %v38, %v164
  %v166 = vpop.f32.mrb[0].mxu0
  %167 = vmatprep.mubr.bf16.mxu0 0
  %168 = vmatmul.mubr.bf16.gmra.mrb[0].mxu0 %v97
  %v169 = vpop.f32.mrb[0].mxu0
  %v170 = vadd.f32 %v38, %v169
  %v171 = vpop.f32.mrb[0].mxu0
  %v172 = vpop.f32.mrb[0].mxu0
  %v173 = vadd.f32 %v38, %v172
  %v174 = vpop.f32.mrb[0].mxu0
  %175 = vmatprep.mubr.bf16.mxu0 0
  %176 = vmatmul.mubr.bf16.gmra.mrb[0].mxu0 %v100
  %v177 = vpop.f32.mrb[0].mxu0
  %v178 = vadd.f32 %v38, %v177
  %v179 = vpop.f32.mrb[0].mxu0
  %v180 = vpop.f32.mrb[0].mxu0
  %v181 = vadd.f32 %v38, %v180
  %v182 = vpop.f32.mrb[0].mxu0
  %183 = vmatprep.mubr.bf16.mxu0 0
  %184 = vmatmul.mubr.bf16.gmra.mrb[0].mxu0 %v103
  %v185 = vpop.f32.mrb[0].mxu0
  %v186 = vadd.f32 %v38, %v185
  %v187 = vpop.f32.mrb[0].mxu0
  %v188 = vpop.f32.mrb[0].mxu0
  %v189 = vadd.f32 %v38, %v188
  %v190 = vpop.f32.mrb[0].mxu0
  %191 = vmatprep.mubr.bf16.mxu0 0
  %192 = vmatmul.mubr.bf16.gmra.mrb[0].mxu0 %v106
  %v193 = vpop.f32.mrb[0].mxu0
  %v194 = vadd.f32 %v38, %v193
  %v195 = vpop.f32.mrb[0].mxu0
  %v196 = vpop.f32.mrb[0].mxu0
  %v197 = vadd.f32 %v38, %v196
  %v198 = vpop.f32.mrb[0].mxu0
  %199 = vmatprep.mubr.bf16.mxu0 0
  %200 = vmatmul.mubr.bf16.gmra.mrb[0].mxu0 %v109
  %v201 = vpop.f32.mrb[0].mxu0
  %v202 = vadd.f32 %v38, %v201
  %v203 = vpop.f32.mrb[0].mxu0
  %v204 = vpop.f32.mrb[0].mxu0
  %v205 = vadd.f32 %v38, %v204
  %v206 = vpop.f32.mrb[0].mxu0
  %207 = vdwg.mxu0
  %vm208 = vcmask 261120
  %209 = vst.msk [vmem:[%s3] sm:$0xff] %vm208, %v146
  %210 = vst.msk [vmem:[%s3 + $0x8] sm:$0xff] %vm208, %v149
  %211 = vst.msk [vmem:[%s3 + $0x10] sm:$0xff] %vm208, %v154
  %212 = vst.msk [vmem:[%s3 + $0x18] sm:$0xff] %vm208, %v157
  %213 = vst.msk [vmem:[%s3 + $0x20] sm:$0xff] %vm208, %v162
  %214 = vst.msk [vmem:[%s3 + $0x28] sm:$0xff] %vm208, %v165
  %215 = vst.msk [vmem:[%s3 + $0x30] sm:$0xff] %vm208, %v170
  %216 = vst.msk [vmem:[%s3 + $0x38] sm:$0xff] %vm208, %v173
  %217 = vst.msk [vmem:[%s3 + $0x40] sm:$0xff] %vm208, %v178
  %218 = vst.msk [vmem:[%s3 + $0x48] sm:$0xff] %vm208, %v181
  %219 = vst.msk [vmem:[%s3 + $0x50] sm:$0xff] %vm208, %v186
  %220 = vst.msk [vmem:[%s3 + $0x58] sm:$0xff] %vm208, %v189
  %221 = vst.msk [vmem:[%s3 + $0x60] sm:$0xff] %vm208, %v194
  %222 = vst.msk [vmem:[%s3 + $0x68] sm:$0xff] %vm208, %v197
  %223 = vst.msk [vmem:[%s3 + $0x70] sm:$0xff] %vm208, %v202
  %224 = vst.msk [vmem:[%s3 + $0x78] sm:$0xff] %vm208, %v205
  // Predicated region
  $region14: #{tpu_custom_call.1} parent=0 // pred_check
    _
  $region15: #{tpu_custom_call.1} parent=0 // pred_check_branch
    %226 = sbr.rel (0) target = $region17
  $region16: #{tpu_custom_call.1} parent=0 // pred_region
    _
  $region17: #{tpu_custom_call.1} parent=0 // pred_fallthru
    _
  // Predicated region
  $region18: #{tpu_custom_call.1} parent=0 // pred_check
    _
  $region19: #{tpu_custom_call.1} parent=0 // pred_check_branch
    %228 = sbr.rel (0) target = $region21
  $region20: #{tpu_custom_call.1} parent=0 // pred_region
    _
  $region21: #{tpu_custom_call.1} parent=0 // pred_fallthru
    _

</llo_original>
